<compile_context>
chip_gen: v5e
topology: v5e:2x2
jax: 0.10.0
libtpu: 0.0.40
codegen_flags: <defaults>
</compile_context>

<pallas_src>
import jax
import jax.numpy as jnp
from jax import lax
from jax.experimental import pallas as pl
from jax.experimental.pallas import tpu as pltpu


def _mlp_kernel(x_ref, w1_ref, b1_ref, w2_ref, b2_ref, w3_ref, b3_ref, o_ref):
    # x_ref: (TILE_B, 10) in the input dtype (original row-major layout).
    # w*:    (out_features, in_features) compute dtype (PyTorch nn.Linear layout).
    # b*:    (out_features, 1) f32.
    # o_ref: (4, TILE_B) -- batch on the 128-lane axis (lane-dense store).
    x = x_ref[...].astype(w1_ref.dtype)                          # (T, 10)

    # Layer 1: contract the shared feature axis (last axis of BOTH operands),
    # i.e. h = W1 @ x^T.  This puts the batch on lanes for everything
    # downstream without any wrapper-side transpose of x.
    dn_last = (((1,), (1,)), ((), ()))
    h = lax.dot_general(w1_ref[...], x, dn_last,
                        preferred_element_type=jnp.float32)      # (8, T) f32
    h = jnp.maximum(h + b1_ref[...], 0.0)

    # Layers 2-3: plain (out, in) @ (in, T) matmuls, f32 accumulation.
    h = jnp.dot(w2_ref[...], h.astype(w2_ref.dtype),
                preferred_element_type=jnp.float32)               # (6, T) f32
    h = jnp.maximum(h + b2_ref[...], 0.0)

    h = jnp.dot(w3_ref[...], h.astype(w3_ref.dtype),
                preferred_element_type=jnp.float32)               # (4, T) f32
    o_ref[...] = (h + b3_ref[...]).astype(o_ref.dtype)


def _pick_tile_and_vmem_limit(batch, tile_b):
    """Pick the batch tile (columns) and scoped-VMEM limit per TPU generation."""
    try:
        vmem_cap = int(pltpu.get_tpu_info().vmem_capacity_bytes)
    except Exception:
        vmem_cap = 64 << 20                       # v7x per-TensorCore floor
    # Leave headroom: ~96 MiB on v5e/v6e (128 MiB physical), ~48 MiB on v7x.
    vmem_limit = max(32 << 20, min(vmem_cap - (16 << 20), 96 << 20))

    # Dominant VMEM cost per batch column: the (TILE_B, 10) f32 input block is
    # lane-padded to 128 in VMEM (512 B/col) and double-buffered; the (4, T)
    # output block and f32/bf16 intermediates add a few hundred bytes.
    # 2 KiB/col is a conservative bound.
    bytes_per_col = 2048
    budget_cols = max(128, (vmem_limit * 3 // 4) // bytes_per_col)

    tile = min(int(tile_b), int(budget_cols))
    if batch > 2 * 128:
        # Keep >= 2 grid steps so ("parallel",) can shard across v7x's two TCs.
        half = -(-batch // 2)
        half = -(-half // 128) * 128
        tile = min(tile, half)
    tile = max(128, (tile // 128) * 128)          # lane-multiple clamp
    if batch <= tile:
        tile = batch                               # single full-array block
    return tile, vmem_limit


def multilayer_network(x, params, *, tile_b=65536, compute_dtype=jnp.bfloat16,
                       out_dtype=None, transposed_output=False):
    """Fused 3-layer MLP forward.

    x:      (B, 10), same layout as the PyTorch module input.
    params: w1 (8,10), b1 (8,1), w2 (6,8), b2 (6,1), w3 (4,6), b3 (4,1)
            (weights in PyTorch nn.Linear layout: (out_features, in_features)).
    Returns (B, 4) (or (4, B) when transposed_output=True, letting the consumer
    fuse the final transpose).
    """
    B, F = x.shape
    assert F == 10, F
    out_dtype = x.dtype if out_dtype is None else out_dtype

    tile, vmem_limit = _pick_tile_and_vmem_limit(B, tile_b)
    grid = (pl.cdiv(B, tile),)

    w1 = params["w1"].astype(compute_dtype)
    w2 = params["w2"].astype(compute_dtype)
    w3 = params["w3"].astype(compute_dtype)
    b1 = params["b1"].astype(jnp.float32)
    b2 = params["b2"].astype(jnp.float32)
    b3 = params["b3"].astype(jnp.float32)

    # Constant index_map -> parameters DMA'd once and kept VMEM-resident.
    resident = lambda shape: pl.BlockSpec(shape, lambda i: (0, 0))

    param_bytes = sum(a.size * a.dtype.itemsize for a in (w1, b1, w2, b2, w3, b3))
    cost = pl.CostEstimate(
        flops=2 * B * (10 * 8 + 8 * 6 + 6 * 4),
        transcendentals=0,
        bytes_accessed=B * 10 * x.dtype.itemsize
        + B * 4 * jnp.dtype(out_dtype).itemsize
        + param_bytes,
    )

    out_t = pl.pallas_call(
        _mlp_kernel,
        out_shape=jax.ShapeDtypeStruct((4, B), out_dtype),
        grid_spec=pltpu.PrefetchScalarGridSpec(
            num_scalar_prefetch=0,
            grid=grid,
            in_specs=[
                pl.BlockSpec((tile, 10), lambda i: (i, 0)),   # x: pipelined over batch
                resident(w1.shape), resident(b1.shape),
                resident(w2.shape), resident(b2.shape),
                resident(w3.shape), resident(b3.shape),
            ],
            out_specs=pl.BlockSpec((4, tile), lambda i: (0, i)),
        ),
        compiler_params=pltpu.CompilerParams(
            dimension_semantics=("parallel",),   # megacore sharding on v7x
            vmem_limit_bytes=int(vmem_limit),
        ),
        cost_estimate=cost,
    )(x, w1, b1, w2, b2, w3, b3)

    if transposed_output:
        return out_t                              # (4, B), lane-dense
    return out_t.T                                # (B, 4), module layout


def init_params(key):
    """PyTorch nn.Linear default init: U(-1/sqrt(fan_in), +1/sqrt(fan_in)).
    Weights in PyTorch layout (out_features, in_features); biases (out, 1)."""
    dims = [(10, 8), (8, 6), (6, 4)]
    params = {}
    keys = jax.random.split(key, 2 * len(dims))
    for i, (fan_in, fan_out) in enumerate(dims):
        bound = float(fan_in) ** -0.5
        params[f"w{i + 1}"] = jax.random.uniform(
            keys[2 * i], (fan_out, fan_in), minval=-bound, maxval=bound,
            dtype=jnp.float32)
        params[f"b{i + 1}"] = jax.random.uniform(
            keys[2 * i + 1], (fan_out, 1), minval=-bound, maxval=bound,
            dtype=jnp.float32)
    return params


def _reference(x, p):
    h = jnp.maximum(x @ p["w1"].T + p["b1"].T, 0.0)
    h = jnp.maximum(h @ p["w2"].T + p["b2"].T, 0.0)
    return h @ p["w3"].T + p["b3"].T


if __name__ == "__main__":
    key = jax.random.PRNGKey(0)
    k_x, k_p = jax.random.split(key)
    params = init_params(k_p)

    # 1) Small batch (single full-array block), f32 compute: exact layout check.
    batch = 8
    x = jax.random.normal(k_x, (batch, 10), dtype=jnp.float32)
    ref = _reference(x, params)
    out_f32 = jax.block_until_ready(
        multilayer_network(x, params, compute_dtype=jnp.float32))
    assert out_f32.shape == (batch, 4), out_f32.shape
    assert jnp.allclose(out_f32, ref, atol=1e-5, rtol=1e-5), "f32 mismatch vs reference"

    # 2) Default bf16 compute path (performance configuration): loose tolerance
    #    for bf16 input/weight rounding; accumulation stays f32.
    out_bf16 = jax.block_until_ready(multilayer_network(x, params))
    assert out_bf16.shape == (batch, 4), out_bf16.shape
    assert jnp.allclose(out_bf16, ref, atol=5e-2, rtol=5e-2), "bf16 mismatch vs reference"

    # 3) Multi-step grid with a masked partial last block (no batch padding):
    #    B=300, tile forced to 128 -> grid=3, last block covers rows 256..383.
    x2 = jax.random.normal(jax.random.PRNGKey(1), (300, 10), dtype=jnp.float32)
    ref2 = _reference(x2, params)
    out2 = jax.block_until_ready(
        multilayer_network(x2, params, tile_b=128, compute_dtype=jnp.float32))
    assert out2.shape == (300, 4), out2.shape
    assert jnp.allclose(out2, ref2, atol=1e-5, rtol=1e-5), "partial-block mismatch"

    print("KERNEL_OK")
</pallas_src>

<mosaic_0001>
module attributes {stable_mosaic.version = 11 : i64} {
  func.func @_mlp_kernel(%arg0: i32, %arg1: memref<8x10xf32, #tpu.memory_space<vmem>>, %arg2: memref<8x10xf32, #tpu.memory_space<vmem>>, %arg3: memref<8x1xf32, #tpu.memory_space<vmem>>, %arg4: memref<6x8xf32, #tpu.memory_space<vmem>>, %arg5: memref<6x1xf32, #tpu.memory_space<vmem>>, %arg6: memref<4x6xf32, #tpu.memory_space<vmem>>, %arg7: memref<4x1xf32, #tpu.memory_space<vmem>>, %arg8: memref<4x8xf32, #tpu.memory_space<vmem>>) attributes {dimension_semantics = [#tpu.dimension_semantics<parallel>], iteration_bounds = array<i64: 1>, scalar_prefetch = 0 : i64, scratch_operands = 0 : i64, tpu.core_type = #tpu.core_type<tc>, window_params = [{transform_indices = @transform_0, window_bounds = array<i64: 8, 10>}, {pipeline_mode = #tpu.pipeline_mode<synchronous>, transform_indices = @transform_1, window_bounds = array<i64: 8, 10>}, {pipeline_mode = #tpu.pipeline_mode<synchronous>, transform_indices = @transform_2, window_bounds = array<i64: 8, 1>}, {pipeline_mode = #tpu.pipeline_mode<synchronous>, transform_indices = @transform_3, window_bounds = array<i64: 6, 8>}, {pipeline_mode = #tpu.pipeline_mode<synchronous>, transform_indices = @transform_4, window_bounds = array<i64: 6, 1>}, {pipeline_mode = #tpu.pipeline_mode<synchronous>, transform_indices = @transform_5, window_bounds = array<i64: 4, 6>}, {pipeline_mode = #tpu.pipeline_mode<synchronous>, transform_indices = @transform_6, window_bounds = array<i64: 4, 1>}, {transform_indices = @transform_7, window_bounds = array<i64: 4, 8>}]} {
    %c0 = arith.constant 0 : index
    %c0_0 = arith.constant 0 : index
    %0 = vector.load %arg1[%c0, %c0_0] : memref<8x10xf32, #tpu.memory_space<vmem>>, vector<8x10xf32>
    %c0_1 = arith.constant 0 : index
    %c0_2 = arith.constant 0 : index
    %1 = vector.load %arg2[%c0_1, %c0_2] : memref<8x10xf32, #tpu.memory_space<vmem>>, vector<8x10xf32>
    %cst = arith.constant dense<0.000000e+00> : vector<8x8xf32>
    %2 = tpu.matmul %1, %0, %cst {dimension_numbers = #tpu.dot_dimension_numbers<[1], [1], [0], [0], [0, 0, 1, 0], [], []>} : vector<8x10xf32>, vector<8x10xf32>, vector<8x8xf32> -> vector<8x8xf32>
    %c0_3 = arith.constant 0 : index
    %c0_4 = arith.constant 0 : index
    %3 = vector.load %arg3[%c0_3, %c0_4] : memref<8x1xf32, #tpu.memory_space<vmem>>, vector<8x1xf32>
    %4 = vector.broadcast %3 : vector<8x1xf32> to vector<8x8xf32>
    %5 = arith.addf %2, %4 : vector<8x8xf32>
    %cst_5 = arith.constant 0.000000e+00 : f32
    %6 = vector.broadcast %cst_5 : f32 to vector<8x8xf32>
    %7 = arith.maximumf %5, %6 : vector<8x8xf32>
    %c0_6 = arith.constant 0 : index
    %c0_7 = arith.constant 0 : index
    %8 = vector.load %arg4[%c0_6, %c0_7] : memref<6x8xf32, #tpu.memory_space<vmem>>, vector<6x8xf32>
    %cst_8 = arith.constant dense<0.000000e+00> : vector<6x8xf32>
    %9 = tpu.matmul %8, %7, %cst_8 {dimension_numbers = #tpu.dot_dimension_numbers<[1], [0], [0], [1], [0, 0, 1, 1], [], []>} : vector<6x8xf32>, vector<8x8xf32>, vector<6x8xf32> -> vector<6x8xf32>
    %c0_9 = arith.constant 0 : index
    %c0_10 = arith.constant 0 : index
    %10 = vector.load %arg5[%c0_9, %c0_10] : memref<6x1xf32, #tpu.memory_space<vmem>>, vector<6x1xf32>
    %11 = vector.broadcast %10 : vector<6x1xf32> to vector<6x8xf32>
    %12 = arith.addf %9, %11 : vector<6x8xf32>
    %cst_11 = arith.constant 0.000000e+00 : f32
    %13 = vector.broadcast %cst_11 : f32 to vector<6x8xf32>
    %14 = arith.maximumf %12, %13 : vector<6x8xf32>
    %c0_12 = arith.constant 0 : index
    %c0_13 = arith.constant 0 : index
    %15 = vector.load %arg6[%c0_12, %c0_13] : memref<4x6xf32, #tpu.memory_space<vmem>>, vector<4x6xf32>
    %cst_14 = arith.constant dense<0.000000e+00> : vector<4x8xf32>
    %16 = tpu.matmul %15, %14, %cst_14 {dimension_numbers = #tpu.dot_dimension_numbers<[1], [0], [0], [1], [0, 0, 1, 1], [], []>} : vector<4x6xf32>, vector<6x8xf32>, vector<4x8xf32> -> vector<4x8xf32>
    %c0_15 = arith.constant 0 : index
    %c0_16 = arith.constant 0 : index
    %17 = vector.load %arg7[%c0_15, %c0_16] : memref<4x1xf32, #tpu.memory_space<vmem>>, vector<4x1xf32>
    %18 = vector.broadcast %17 : vector<4x1xf32> to vector<4x8xf32>
    %19 = arith.addf %16, %18 : vector<4x8xf32>
    %c0_17 = arith.constant 0 : index
    %c0_18 = arith.constant 0 : index
    %20 = vector.load %arg8[%c0_17, %c0_18] : memref<4x8xf32, #tpu.memory_space<vmem>>, vector<4x8xf32>
    tpu.vector_store %arg8[%c0_17, %c0_18], %19 {strides = array<i32>} : memref<4x8xf32, #tpu.memory_space<vmem>>, vector<4x8xf32>,
    return
  }
  func.func @transform_0(%arg0: i32) -> (i32, i32) {
    %c0_i32 = arith.constant 0 : i32
    %c0_i32_0 = arith.constant 0 : i32
    return %arg0, %c0_i32 : i32, i32
  }
  func.func @transform_1(%arg0: i32) -> (i32, i32) {
    %c0_i32 = arith.constant 0 : i32
    %c0_i32_0 = arith.constant 0 : i32
    %c0_i32_1 = arith.constant 0 : i32
    return %c0_i32, %c0_i32_0 : i32, i32
  }
  func.func @transform_2(%arg0: i32) -> (i32, i32) {
    %c0_i32 = arith.constant 0 : i32
    %c0_i32_0 = arith.constant 0 : i32
    %c0_i32_1 = arith.constant 0 : i32
    return %c0_i32, %c0_i32_0 : i32, i32
  }
  func.func @transform_3(%arg0: i32) -> (i32, i32) {
    %c0_i32 = arith.constant 0 : i32
    %c0_i32_0 = arith.constant 0 : i32
    %c0_i32_1 = arith.constant 0 : i32
    return %c0_i32, %c0_i32_0 : i32, i32
  }
  func.func @transform_4(%arg0: i32) -> (i32, i32) {
    %c0_i32 = arith.constant 0 : i32
    %c0_i32_0 = arith.constant 0 : i32
    %c0_i32_1 = arith.constant 0 : i32
    return %c0_i32, %c0_i32_0 : i32, i32
  }
  func.func @transform_5(%arg0: i32) -> (i32, i32) {
    %c0_i32 = arith.constant 0 : i32
    %c0_i32_0 = arith.constant 0 : i32
    %c0_i32_1 = arith.constant 0 : i32
    return %c0_i32, %c0_i32_0 : i32, i32
  }
  func.func @transform_6(%arg0: i32) -> (i32, i32) {
    %c0_i32 = arith.constant 0 : i32
    %c0_i32_0 = arith.constant 0 : i32
    %c0_i32_1 = arith.constant 0 : i32
    return %c0_i32, %c0_i32_0 : i32, i32
  }
  func.func @transform_7(%arg0: i32) -> (i32, i32) {
    %c0_i32 = arith.constant 0 : i32
    %c0_i32_0 = arith.constant 0 : i32
    return %c0_i32, %arg0 : i32, i32
  }
}

</mosaic_0001>

<llo_original>
// kernel: tpu_custom_call.1
$region0: #{tpu_custom_call.1}
  #allocation0 [shape = 'u32[]', space=smem, size = 0x4, offset = 0x4, fixed_abs, tag = 'smem constant byte address 0x4 - core index']
  #allocation1 [shape = 'u32[72,128]{1,0:T(1,128)}', space=vmem, size = 0x9000, scoped, tag = 'internal scratch']
  %s0 = inlined_call_operand.vmem [shape: f32[8,10], index: 0, kind: input, shape index: {}]
  %s1 = inlined_call_operand.vmem [shape: f32[8,10], index: 1, kind: input, shape index: {}]
  %s2 = inlined_call_operand.vmem [shape: f32[8,1], index: 2, kind: input, shape index: {}]
  %s3 = inlined_call_operand.vmem [shape: f32[6,8], index: 3, kind: input, shape index: {}]
  %s4 = inlined_call_operand.vmem [shape: f32[6,1], index: 4, kind: input, shape index: {}]
  %s5 = inlined_call_operand.hbm [shape: f32[4,6], index: 5, kind: input, shape index: {}]
  %s6 = inlined_call_operand.vmem [shape: f32[4,1], index: 6, kind: input, shape index: {}]
  %s7 = inlined_call_operand.hbm [shape: f32[4,8], index: 7, kind: output, shape index: {}]
  %s8 = sld [smem:[#allocation0]]
  $region42: #{tpu_custom_call.1} parent=0
    _
  %s10 = ssub.s32 1, %s8
  %s11 = scalar_select 0, %s10, %s8
  $region1: #{tpu_custom_call.1} parent=0
    #allocation2 [shape = 'u8[2048]{0}', space=vmem, size = 0x800, scoped, tag = 'input window, operand 5, single buffered']
    #allocation3 [shape = 's32[1]{0}', space=sflag, size = 0x4, scoped, tag = 'scoped memory for tpu_custom_call.1']
    #allocation4 [shape = 's32[1]{0}', space=sflag, size = 0x4, scoped, tag = 'scoped memory for tpu_custom_call.1']
    #allocation5 [shape = 'u8[2048]{0}', space=vmem, size = 0x800, scoped, tag = 'output window, operand 0, single buffered']
    %12 = vsyncpa [#allocation3], 0
    %13 = vsyncpa [#allocation4], 0
    // Predicated region
    $region2: #{tpu_custom_call.1} parent=1 // pred_check
      _
    $region3: #{tpu_custom_call.1} parent=1 // pred_check_branch
      %15 = sbr.rel (0) target = $region5
    $region4: #{tpu_custom_call.1} parent=1 // pred_region
      _
    $region5: #{tpu_custom_call.1} parent=1 // pred_fallthru
      _
    // Predicated region
    $region6: #{tpu_custom_call.1} parent=1 // pred_check
      _
    $region7: #{tpu_custom_call.1} parent=1 // pred_check_branch
      %17 = sbr.rel (0) target = $region9
    $region8: #{tpu_custom_call.1} parent=1 // pred_region
      _
    $region9: #{tpu_custom_call.1} parent=1 // pred_fallthru
      _
    // Predicated region
    $region10: #{tpu_custom_call.1} parent=1 // pred_check
      _
    $region11: #{tpu_custom_call.1} parent=1 // pred_check_branch
      %19 = sbr.rel (0) target = $region13
    $region12: #{tpu_custom_call.1} parent=1 // pred_region
      _
    $region13: #{tpu_custom_call.1} parent=1 // pred_fallthru
      _
    // Predicated region
    $region14: #{tpu_custom_call.1} parent=1 // pred_check
      _
    $region15: #{tpu_custom_call.1} parent=1 // pred_check_branch
      %21 = sbr.rel (0) target = $region17
    $region16: #{tpu_custom_call.1} parent=1 // pred_region
      _
    $region17: #{tpu_custom_call.1} parent=1 // pred_fallthru
      _
    // Predicated region
    $region18: #{tpu_custom_call.1} parent=1 // pred_check
      _
    $region19: #{tpu_custom_call.1} parent=1 // pred_check_branch
      %23 = sbr.rel (0) target = $region21
    $region20: #{tpu_custom_call.1} parent=1 // pred_region
      _
    $region21: #{tpu_custom_call.1} parent=1 // pred_fallthru
      _
    // Predicated region
    $region22: #{tpu_custom_call.1} parent=1 // pred_check
      _
    $region23: #{tpu_custom_call.1} parent=1 // pred_check_branch
      %25 = sbr.rel (0) target = $region25
    $region24: #{tpu_custom_call.1} parent=1 // pred_region
      %27 = vsyncadd [#allocation3], 0
      %s29 = sshll.u32 %s5, 4
      %s30 = int_to_ptr.hbm [resolvable:$true] %s29
      %s31 = sshll.u32 [#allocation2], 4
      %s32 = int_to_ptr.vmem [resolvable:$true] %s31
      %34 = dma.hbm_to_vmem [thread:$0]  %s30, 64, %s32, [#allocation3]
    $region25: #{tpu_custom_call.1} parent=1 // pred_fallthru
      _
    // Predicated region
    $region26: #{tpu_custom_call.1} parent=1 // pred_check
      _
    $region27: #{tpu_custom_call.1} parent=1 // pred_check_branch
      %36 = sbr.rel (0) target = $region29
    $region28: #{tpu_custom_call.1} parent=1 // pred_region
      _
    $region29: #{tpu_custom_call.1} parent=1 // pred_fallthru
      _
    // Predicated region
    $region30: #{tpu_custom_call.1} parent=1 // pred_check
      _
    $region31: #{tpu_custom_call.1} parent=1 // pred_check_branch
      %38 = sbr.rel (0) target = $region33
    $region32: #{tpu_custom_call.1} parent=1 // pred_region
      %40 = dma.done [#allocation3], 64
    $region33: #{tpu_custom_call.1} parent=1 // pred_fallthru
      _
    %v41 = vld [vmem:[%s0] sm:$0xff]
    %v42 = vld [vmem:[%s1] sm:$0xff]
    %v43 = vld [vmem:[%s2] sm:$0xff]
    %45 = vset.pattern.permute.xlu0 0
    %46 = vperm.xlu0 %45, %v43
    %v47 = vpop.permute.xlu0 %46
    %vm49 = vcmask 80896
    %v51 = vsel %vm49, %v42, 0
    %v54 = vsel %vm49, %v41, 0
    %56 = vmatpush.xpose.msra.mxu0 0.0
    %57 = vmatpush.xpose.msra.mxu0 0.0
    %58 = vmatpush.xpose.msra.mxu0 0.0
    %59 = vmatpush.xpose.msra.mxu0 0.0
    %60 = vmatpush.xpose.msra.mxu0 0.0
    %61 = vmatpush.xpose.msra.mxu0 0.0
    %62 = vmatpush.xpose.msra.mxu0 0.0
    %63 = vmatpush.xpose.msra.mxu0 0.0
    %64 = vmatpush.xpose.msra.mxu0 0.0
    %65 = vmatpush.xpose.msra.mxu0 0.0
    %66 = vmatpush.xpose.msra.mxu0 0.0
    %67 = vmatpush.xpose.msra.mxu0 0.0
    %68 = vmatpush.xpose.msra.mxu0 0.0
    %69 = vmatpush.xpose.msra.mxu0 0.0
    %70 = vmatpush.xpose.msra.mxu0 0.0
    %71 = vmatpush.xpose.msra.mxu0 %v54
    %72 = vmatmul.f32.gmra.mxu0 %v51
    %v73 = vpop.f32.mrf.mxu0
    %v74 = vadd.f32 %v47, %v73
    %75 = vdwg.mxu0
    %v76 = vmax.f32 %v74, 0.0
    %v77 = vld [vmem:[%s3] sm:$0x3f]
    %v78 = vld [vmem:[%s4] sm:$0x3f]
    %80 = vset.pattern.permute.xlu0 0
    %81 = vperm.xlu0 %80, %v78
    %v82 = vpop.permute.xlu0 %81
    %vm84 = vcmask 64512
    %v86 = vsel %vm84, %v77, 0
    %88 = vmatpush.msra.mxu0 0.0
    %89 = vmatpush.msra.mxu0 0.0
    %90 = vmatpush.msra.mxu0 0.0
    %91 = vmatpush.msra.mxu0 0.0
    %92 = vmatpush.msra.mxu0 0.0
    %93 = vmatpush.msra.mxu0 0.0
    %94 = vmatpush.msra.mxu0 0.0
    %95 = vmatpush.msra.mxu0 0.0
    %96 = vmatpush.msra.mxu0 0.0
    %97 = vmatpush.msra.mxu0 0.0
    %98 = vmatpush.msra.mxu0 0.0
    %99 = vmatpush.msra.mxu0 0.0
    %100 = vmatpush.msra.mxu0 0.0
    %101 = vmatpush.msra.mxu0 0.0
    %102 = vmatpush.msra.mxu0 0.0
    %103 = vmatpush.msra.mxu0 %v76
    %104 = vmatmul.f32.gmra.mxu0 %v86
    %v105 = vpop.f32.mrf.mxu0
    %v106 = vadd.f32 %v82, %v105
    %107 = vdwg.mxu0
    %v108 = vmax.f32 %v106, 0.0
    %v109 = vld [vmem:[#allocation2] sm:$0xf]
    %v110 = vld [vmem:[%s6] sm:$0xf]
    %112 = vset.pattern.permute.xlu0 0
    %113 = vperm.xlu0 %112, %v110
    %v114 = vpop.permute.xlu0 %113
    %vm116 = vcmask 48128
    %v118 = vsel %vm116, %v109, 0
    %vm120 = vcmask 1045504
    %v122 = vsel %vm120, %v108, 0
    %124 = vmatpush.msra.mxu0 0.0
    %125 = vmatpush.msra.mxu0 0.0
    %126 = vmatpush.msra.mxu0 0.0
    %127 = vmatpush.msra.mxu0 0.0
    %128 = vmatpush.msra.mxu0 0.0
    %129 = vmatpush.msra.mxu0 0.0
    %130 = vmatpush.msra.mxu0 0.0
    %131 = vmatpush.msra.mxu0 0.0
    %132 = vmatpush.msra.mxu0 0.0
    %133 = vmatpush.msra.mxu0 0.0
    %134 = vmatpush.msra.mxu0 0.0
    %135 = vmatpush.msra.mxu0 0.0
    %136 = vmatpush.msra.mxu0 0.0
    %137 = vmatpush.msra.mxu0 0.0
    %138 = vmatpush.msra.mxu0 0.0
    %139 = vmatpush.msra.mxu0 %v122
    %140 = vmatmul.f32.gmra.mxu0 %v118
    %v141 = vpop.f32.mrf.mxu0
    %v142 = vadd.f32 %v114, %v141
    %143 = vdwg.mxu0
    %vm144 = vcmask 60416
    %145 = vst.msk [vmem:[#allocation5] sm:$0xf] %vm144, %v142
    // Predicated region
    $region34: #{tpu_custom_call.1} parent=1 // pred_check
      _
    $region35: #{tpu_custom_call.1} parent=1 // pred_check_branch
      %147 = sbr.rel (0) target = $region37
    $region36: #{tpu_custom_call.1} parent=1 // pred_region
      %149 = vsyncadd [#allocation4], 0
      %s151 = sshll.u32 [#allocation5], 4
      %s152 = int_to_ptr.vmem [resolvable:$true] %s151
      %s153 = sshll.u32 %s7, 4
      %s154 = int_to_ptr.hbm [resolvable:$true] %s153
      %156 = dma.vmem_to_hbm [thread:$0]  %s152, 64, %s154, [#allocation4]
    $region37: #{tpu_custom_call.1} parent=1 // pred_fallthru
      _
    // Predicated region
    $region38: #{tpu_custom_call.1} parent=1 // pred_check
      _
    $region39: #{tpu_custom_call.1} parent=1 // pred_check_branch
      %158 = sbr.rel (0) target = $region41
    $region40: #{tpu_custom_call.1} parent=1 // pred_region
      %160 = dma.done [#allocation4], 64
    $region41: #{tpu_custom_call.1} parent=1 // pred_fallthru
      _
    %161 = vsyncpa [#allocation3], 1
    %162 = vsyncpa [#allocation4], 1

</llo_original>
